<compile_context>
chip_gen: v7x
topology: tpu7x:2x2x1
jax: 0.10.0
libtpu: 0.0.40
codegen_flags: <defaults>
</compile_context>

<pallas_src>
import jax
import jax.numpy as jnp
from jax.experimental import pallas as pl
from jax.experimental.pallas import tpu as pltpu


def _simplenet_kernel(x_ref, w1_ref, b1_ref, w2_ref, b2_ref, w3_ref, b3_ref,
                      o_ref, h2_ref):
    j = pl.program_id(1)

    # fc1 + ReLU and fc2 + ReLU only once per batch tile; cache h2 (bf16) in
    # VMEM scratch and reuse it across all N-tiles of fc3.
    @pl.when(j == 0)
    def _():
        h1 = jnp.dot(x_ref[...], w1_ref[...],
                     preferred_element_type=jnp.float32) + b1_ref[...]
        h1 = jnp.maximum(h1, 0.0).astype(jnp.bfloat16)
        h2 = jnp.dot(h1, w2_ref[...],
                     preferred_element_type=jnp.float32) + b2_ref[...]
        h2_ref[...] = jnp.maximum(h2, 0.0).astype(jnp.bfloat16)

    # fc3 (current N-tile) + sigmoid via EUP exp + approx reciprocal.
    logits = jnp.dot(h2_ref[...], w3_ref[...],
                     preferred_element_type=jnp.float32) + b3_ref[...]
    o_ref[...] = pl.reciprocal(1.0 + jnp.exp(-logits), approx=True)


def simplenet_forward(x, params, *, tb_max=512, tn=512):
    """x: [B, 10] float32.  params: dict of f32 (w1,b1,w2,b2,w3,b3).

    Weights stored as [in_features, out_features]; biases as [1, out]."""
    B, K = x.shape
    w1 = params["w1"].astype(jnp.bfloat16)   # [10, 50]
    w2 = params["w2"].astype(jnp.bfloat16)   # [50, 100]
    w3 = params["w3"].astype(jnp.bfloat16)   # [100, 4096]
    b1 = params["b1"].astype(jnp.float32)    # [1, 50]
    b2 = params["b2"].astype(jnp.float32)    # [1, 100]
    b3 = params["b3"].astype(jnp.float32)    # [1, 4096]
    H2 = w2.shape[1]
    N = w3.shape[1]
    assert N % tn == 0, "output dim must be a multiple of the N tile"

    # Batch tiling: pad to a sublane multiple (8); cap the tile at tb_max
    # (512 rows => 1 MiB f32 output tile, VMEM-safe even on v7x's 64 MiB).
    b8 = ((B + 7) // 8) * 8
    tb = b8 if b8 <= tb_max else tb_max
    bp = ((b8 + tb - 1) // tb) * tb

    xb = x.astype(jnp.bfloat16)
    if bp != B:
        xb = jnp.pad(xb, ((0, bp - B), (0, 0)))

    nb, nj = bp // tb, N // tn

    # Advisory cost estimate for XLA's scheduler (fc1/fc2 done once per row).
    flops = 2 * bp * (10 * 50 + 50 * H2) + 2 * bp * H2 * N
    transcendentals = bp * N                      # exp in sigmoid
    bytes_accessed = (
        xb.size * 2                               # bf16 input
        + (w1.size + w2.size + w3.size) * 2       # bf16 weights
        + (b1.size + b2.size + b3.size) * 4       # f32 biases
        + bp * N * 4                              # f32 output
    )

    out = pl.pallas_call(
        _simplenet_kernel,
        out_shape=jax.ShapeDtypeStruct((bp, N), jnp.float32),
        grid_spec=pltpu.PrefetchScalarGridSpec(
            num_scalar_prefetch=0,
            grid=(nb, nj),
            in_specs=[
                pl.BlockSpec((tb, K), lambda i, j: (i, 0)),            # x tile
                pl.BlockSpec(w1.shape, lambda i, j: (0, 0)),           # resident
                pl.BlockSpec(b1.shape, lambda i, j: (0, 0)),           # resident
                pl.BlockSpec(w2.shape, lambda i, j: (0, 0)),           # resident
                pl.BlockSpec(b2.shape, lambda i, j: (0, 0)),           # resident
                pl.BlockSpec((w3.shape[0], tn), lambda i, j: (0, j)),  # w3 N-tile
                pl.BlockSpec((1, tn), lambda i, j: (0, j)),            # b3 N-tile
            ],
            out_specs=pl.BlockSpec((tb, tn), lambda i, j: (i, j)),
            scratch_shapes=[pltpu.VMEM((tb, H2), jnp.bfloat16)],       # cached h2
        ),
        compiler_params=pltpu.CompilerParams(
            dimension_semantics=("parallel", "arbitrary")),
        cost_estimate=pl.CostEstimate(
            flops=flops,
            transcendentals=transcendentals,
            bytes_accessed=bytes_accessed),
    )(xb, w1, b1, w2, b2, w3, b3)

    return out[:B] if bp != B else out


def init_params(key):
    """Deterministic synthetic parameters matching SimpleNet's shapes (f32)."""
    ks = jax.random.split(key, 6)

    def linear(kw, kb, fan_in, fan_out):
        bound = 1.0 / jnp.sqrt(fan_in)
        w = jax.random.uniform(kw, (fan_in, fan_out), jnp.float32,
                               minval=-bound, maxval=bound)
        b = jax.random.uniform(kb, (1, fan_out), jnp.float32,
                               minval=-bound, maxval=bound)
        return w, b

    w1, b1 = linear(ks[0], ks[1], 10, 50)
    w2, b2 = linear(ks[2], ks[3], 50, 100)
    w3, b3 = linear(ks[4], ks[5], 100, 4096)
    return {"w1": w1, "b1": b1, "w2": w2, "b2": b2, "w3": w3, "b3": b3}


if __name__ == "__main__":
    key = jax.random.PRNGKey(0)
    kx, kp = jax.random.split(key)

    B = 8
    x = jax.random.normal(kx, (B, 10), dtype=jnp.float32)
    params = init_params(kp)

    out = simplenet_forward(x, params)
    out = jax.block_until_ready(out)
    assert out.shape == (B, 4096)

    # Reference matching the kernel's bf16 weight/activation precision.
    xb = x.astype(jnp.bfloat16)
    w1b = params["w1"].astype(jnp.bfloat16)
    w2b = params["w2"].astype(jnp.bfloat16)
    w3b = params["w3"].astype(jnp.bfloat16)
    h1 = jnp.maximum(jnp.dot(xb, w1b, preferred_element_type=jnp.float32)
                     + params["b1"], 0.0).astype(jnp.bfloat16)
    h2 = jnp.maximum(jnp.dot(h1, w2b, preferred_element_type=jnp.float32)
                     + params["b2"], 0.0).astype(jnp.bfloat16)
    ref_bf16 = jax.nn.sigmoid(
        jnp.dot(h2, w3b, preferred_element_type=jnp.float32) + params["b3"])
    assert jnp.allclose(out, ref_bf16, atol=5e-3, rtol=1e-3)

    # Looser sanity check against the pure-f32 reference.
    h1f = jnp.maximum(x @ params["w1"] + params["b1"], 0.0)
    h2f = jnp.maximum(h1f @ params["w2"] + params["b2"], 0.0)
    ref_f32 = jax.nn.sigmoid(h2f @ params["w3"] + params["b3"])
    assert jnp.allclose(out, ref_f32, atol=3e-2)

    print("KERNEL_OK")
</pallas_src>

<mosaic_0001>
module attributes {stable_mosaic.version = 11 : i64} {
  func.func @_simplenet_kernel(%arg0: i32, %arg1: i32, %arg2: memref<8x10xbf16, #tpu.memory_space<vmem>>, %arg3: memref<10x50xbf16, #tpu.memory_space<vmem>>, %arg4: memref<1x50xf32, #tpu.memory_space<vmem>>, %arg5: memref<50x100xbf16, #tpu.memory_space<vmem>>, %arg6: memref<1x100xf32, #tpu.memory_space<vmem>>, %arg7: memref<100x512xbf16, #tpu.memory_space<vmem>>, %arg8: memref<1x512xf32, #tpu.memory_space<vmem>>, %arg9: memref<8x512xf32, #tpu.memory_space<vmem>>, %arg10: memref<8x100xbf16, #tpu.memory_space<vmem>>) attributes {dimension_semantics = [#tpu.dimension_semantics<parallel>, #tpu.dimension_semantics<arbitrary>], iteration_bounds = array<i64: 1, 8>, scalar_prefetch = 0 : i64, scratch_operands = 1 : i64, tpu.core_type = #tpu.core_type<tc>, window_params = [{transform_indices = @transform_0, window_bounds = array<i64: 8, 10>}, {pipeline_mode = #tpu.pipeline_mode<synchronous>, transform_indices = @transform_1, window_bounds = array<i64: 10, 50>}, {pipeline_mode = #tpu.pipeline_mode<synchronous>, transform_indices = @transform_2, window_bounds = array<i64: 1, 50>}, {pipeline_mode = #tpu.pipeline_mode<synchronous>, transform_indices = @transform_3, window_bounds = array<i64: 50, 100>}, {pipeline_mode = #tpu.pipeline_mode<synchronous>, transform_indices = @transform_4, window_bounds = array<i64: 1, 100>}, {transform_indices = @transform_5, window_bounds = array<i64: 100, 512>}, {transform_indices = @transform_6, window_bounds = array<i64: 1, 512>}, {transform_indices = @transform_7, window_bounds = array<i64: 8, 512>}]} {
    %c0_i32 = arith.constant 0 : i32
    %0 = arith.cmpi eq, %arg1, %c0_i32 : i32
    %1 = arith.extui %0 : i1 to i32
    %c0_i32_0 = arith.constant 0 : i32
    %2 = arith.cmpi ne, %1, %c0_i32_0 : i32
    scf.if %2 {
      %c0_10 = arith.constant 0 : index
      %c0_11 = arith.constant 0 : index
      %16 = vector.load %arg2[%c0_10, %c0_11] : memref<8x10xbf16, #tpu.memory_space<vmem>>, vector<8x10xbf16>
      %c0_12 = arith.constant 0 : index
      %c0_13 = arith.constant 0 : index
      %17 = vector.load %arg3[%c0_12, %c0_13] : memref<10x50xbf16, #tpu.memory_space<vmem>>, vector<10x50xbf16>
      %cst_14 = arith.constant dense<0.000000e+00> : vector<8x50xf32>
      %18 = tpu.matmul %16, %17, %cst_14 {dimension_numbers = #tpu.dot_dimension_numbers<[1], [0], [0], [1], [0, 0, 1, 1], [], []>} : vector<8x10xbf16>, vector<10x50xbf16>, vector<8x50xf32> -> vector<8x50xf32>
      %c0_15 = arith.constant 0 : index
      %c0_16 = arith.constant 0 : index
      %19 = vector.load %arg4[%c0_15, %c0_16] : memref<1x50xf32, #tpu.memory_space<vmem>>, vector<1x50xf32>
      %20 = vector.broadcast %19 : vector<1x50xf32> to vector<8x50xf32>
      %21 = arith.addf %18, %20 : vector<8x50xf32>
      %cst_17 = arith.constant 0.000000e+00 : f32
      %22 = vector.broadcast %cst_17 : f32 to vector<8x50xf32>
      %23 = arith.maximumf %21, %22 : vector<8x50xf32>
      %24 = arith.truncf %23 : vector<8x50xf32> to vector<8x50xbf16>
      %c0_18 = arith.constant 0 : index
      %c0_19 = arith.constant 0 : index
      %25 = vector.load %arg5[%c0_18, %c0_19] : memref<50x100xbf16, #tpu.memory_space<vmem>>, vector<50x100xbf16>
      %cst_20 = arith.constant dense<0.000000e+00> : vector<8x100xf32>
      %26 = tpu.matmul %24, %25, %cst_20 {dimension_numbers = #tpu.dot_dimension_numbers<[1], [0], [0], [1], [0, 0, 1, 1], [], []>} : vector<8x50xbf16>, vector<50x100xbf16>, vector<8x100xf32> -> vector<8x100xf32>
      %c0_21 = arith.constant 0 : index
      %c0_22 = arith.constant 0 : index
      %27 = vector.load %arg6[%c0_21, %c0_22] : memref<1x100xf32, #tpu.memory_space<vmem>>, vector<1x100xf32>
      %28 = vector.broadcast %27 : vector<1x100xf32> to vector<8x100xf32>
      %29 = arith.addf %26, %28 : vector<8x100xf32>
      %cst_23 = arith.constant 0.000000e+00 : f32
      %30 = vector.broadcast %cst_23 : f32 to vector<8x100xf32>
      %31 = arith.maximumf %29, %30 : vector<8x100xf32>
      %32 = arith.truncf %31 : vector<8x100xf32> to vector<8x100xbf16>
      %c0_24 = arith.constant 0 : index
      %c0_25 = arith.constant 0 : index
      %33 = vector.load %arg10[%c0_24, %c0_25] : memref<8x100xbf16, #tpu.memory_space<vmem>>, vector<8x100xbf16>
      tpu.vector_store %arg10[%c0_24, %c0_25], %32 {strides = array<i32>} : memref<8x100xbf16, #tpu.memory_space<vmem>>, vector<8x100xbf16>,
    } else {
    }
    %c0 = arith.constant 0 : index
    %c0_1 = arith.constant 0 : index
    %3 = vector.load %arg10[%c0, %c0_1] : memref<8x100xbf16, #tpu.memory_space<vmem>>, vector<8x100xbf16>
    %c0_2 = arith.constant 0 : index
    %c0_3 = arith.constant 0 : index
    %4 = vector.load %arg7[%c0_2, %c0_3] : memref<100x512xbf16, #tpu.memory_space<vmem>>, vector<100x512xbf16>
    %cst = arith.constant dense<0.000000e+00> : vector<8x512xf32>
    %5 = tpu.matmul %3, %4, %cst {dimension_numbers = #tpu.dot_dimension_numbers<[1], [0], [0], [1], [0, 0, 1, 1], [], []>} : vector<8x100xbf16>, vector<100x512xbf16>, vector<8x512xf32> -> vector<8x512xf32>
    %c0_4 = arith.constant 0 : index
    %c0_5 = arith.constant 0 : index
    %6 = vector.load %arg8[%c0_4, %c0_5] : memref<1x512xf32, #tpu.memory_space<vmem>>, vector<1x512xf32>
    %7 = vector.broadcast %6 : vector<1x512xf32> to vector<8x512xf32>
    %8 = arith.addf %5, %7 : vector<8x512xf32>
    %cst_6 = arith.constant 0.000000e+00 : f32
    %9 = vector.broadcast %cst_6 : f32 to vector<8x512xf32>
    %10 = arith.subf %9, %8 : vector<8x512xf32>
    %11 = math.exp %10 : vector<8x512xf32>
    %cst_7 = arith.constant 1.000000e+00 : f32
    %12 = vector.broadcast %cst_7 : f32 to vector<8x512xf32>
    %13 = arith.addf %12, %11 : vector<8x512xf32>
    %14 = tpu.reciprocal %13 {approx = true} : vector<8x512xf32> -> vector<8x512xf32>
    %c0_8 = arith.constant 0 : index
    %c0_9 = arith.constant 0 : index
    %15 = vector.load %arg9[%c0_8, %c0_9] : memref<8x512xf32, #tpu.memory_space<vmem>>, vector<8x512xf32>
    tpu.vector_store %arg9[%c0_8, %c0_9], %14 {strides = array<i32>} : memref<8x512xf32, #tpu.memory_space<vmem>>, vector<8x512xf32>,
    return
  }
  func.func @transform_0(%arg0: i32, %arg1: i32) -> (i32, i32) {
    %c0_i32 = arith.constant 0 : i32
    %c0_i32_0 = arith.constant 0 : i32
    return %arg0, %c0_i32 : i32, i32
  }
  func.func @transform_1(%arg0: i32, %arg1: i32) -> (i32, i32) {
    %c0_i32 = arith.constant 0 : i32
    %c0_i32_0 = arith.constant 0 : i32
    %c0_i32_1 = arith.constant 0 : i32
    return %c0_i32, %c0_i32_0 : i32, i32
  }
  func.func @transform_2(%arg0: i32, %arg1: i32) -> (i32, i32) {
    %c0_i32 = arith.constant 0 : i32
    %c0_i32_0 = arith.constant 0 : i32
    %c0_i32_1 = arith.constant 0 : i32
    return %c0_i32, %c0_i32_0 : i32, i32
  }
  func.func @transform_3(%arg0: i32, %arg1: i32) -> (i32, i32) {
    %c0_i32 = arith.constant 0 : i32
    %c0_i32_0 = arith.constant 0 : i32
    %c0_i32_1 = arith.constant 0 : i32
    return %c0_i32, %c0_i32_0 : i32, i32
  }
  func.func @transform_4(%arg0: i32, %arg1: i32) -> (i32, i32) {
    %c0_i32 = arith.constant 0 : i32
    %c0_i32_0 = arith.constant 0 : i32
    %c0_i32_1 = arith.constant 0 : i32
    return %c0_i32, %c0_i32_0 : i32, i32
  }
  func.func @transform_5(%arg0: i32, %arg1: i32) -> (i32, i32) {
    %c0_i32 = arith.constant 0 : i32
    %c0_i32_0 = arith.constant 0 : i32
    return %c0_i32, %arg1 : i32, i32
  }
  func.func @transform_6(%arg0: i32, %arg1: i32) -> (i32, i32) {
    %c0_i32 = arith.constant 0 : i32
    %c0_i32_0 = arith.constant 0 : i32
    return %c0_i32, %arg1 : i32, i32
  }
  func.func @transform_7(%arg0: i32, %arg1: i32) -> (i32, i32) {
    %c0_i32 = arith.constant 0 : i32
    return %arg0, %arg1 : i32, i32
  }
}

</mosaic_0001>

<llo_original>
// kernel: tpu_custom_call.1
$region0: #{tpu_custom_call.1}
  #allocation0 [shape = 'u32[]', space=smem, size = 0x4, offset = 0x4, fixed_abs, tag = 'smem constant byte address 0x4 - core index']
  #allocation1 [shape = 'u32[144,128]{1,0:T(1,128)}', space=vmem, size = 0x12000, scoped, tag = 'internal scratch']
  #allocation2 [shape = 'bf16[8,100]{1,0:T(8,128)(2,1)}', space=vmem, size = 0x800, scoped, tag = 'scratch operand']
  %s0 = inlined_call_operand.hbm [shape: bf16[8,10], index: 0, kind: input, shape index: {}]
  %s1 = inlined_call_operand.hbm [shape: bf16[10,50], index: 1, kind: input, shape index: {}]
  %s2 = inlined_call_operand.vmem [shape: f32[1,50], index: 2, kind: input, shape index: {}]
  %s3 = inlined_call_operand.hbm [shape: bf16[50,100], index: 3, kind: input, shape index: {}]
  %s4 = inlined_call_operand.vmem [shape: f32[1,100], index: 4, kind: input, shape index: {}]
  %s5 = inlined_call_operand.hbm [shape: bf16[100,4096], index: 5, kind: input, shape index: {}]
  %s6 = inlined_call_operand.hbm [shape: f32[1,4096], index: 6, kind: input, shape index: {}]
  %s7 = inlined_call_operand.hbm [shape: f32[8,4096], index: 7, kind: output, shape index: {}]
  %s8 = sld [smem:[#allocation0]]
  $region85: #{tpu_custom_call.1} parent=0
    _
  %s10 = ssub.s32 1, %s8
  %s11 = scalar_select 0, %s10, %s8
  $region1: #{tpu_custom_call.1} parent=0
    #allocation3 [shape = 'u8[2048]{0}', space=vmem, size = 0x800, scoped, tag = 'input window, operand 0, single buffered']
    #allocation4 [shape = 's32[2]{0}', space=sflag, size = 0x8, scoped, tag = 'scoped memory for tpu_custom_call.1']
    #allocation5 [shape = 's32[2]{0}', space=sflag, size = 0x8, scoped, tag = 'scoped memory for tpu_custom_call.1']
    #allocation6 [shape = 'u8[4096]{0}', space=vmem, size = 0x1000, scoped, tag = 'input window, operand 1, single buffered']
    #allocation7 [shape = 's32[1]{0}', space=sflag, size = 0x4, scoped, tag = 'scoped memory for tpu_custom_call.1']
    #allocation8 [shape = 'u8[14336]{0}', space=vmem, size = 0x3800, scoped, tag = 'input window, operand 3, single buffered']
    #allocation9 [shape = 'u8[212992]{0}', space=vmem, size = 0x34000, scoped, tag = 'input window, operand 5']
    #allocation10 [shape = 's32[2]{0}', space=sflag, size = 0x8, scoped, tag = 'scoped memory for tpu_custom_call.1']
    #allocation11 [shape = 'u8[4096]{0}', space=vmem, size = 0x1000, scoped, tag = 'input window, operand 6']
    #allocation12 [shape = 'u8[32768]{0}', space=vmem, size = 0x8000, scoped, tag = 'output window, operand 0']
    %12 = vsyncpa [#allocation4], 0
    %13 = vsyncpa [#allocation7], 0
    %14 = vsyncpa [#allocation10], 0
    %s15 = scalar_lea.sflag [#allocation10], 1
    %16 = vsyncpa %s15, 0
    %17 = vsyncpa [#allocation5], 0
    %s18 = scalar_lea.sflag [#allocation5], 1
    %19 = vsyncpa %s18, 0
    loop: start=0, step=1, limit=10
    $region2: #{tpu_custom_call.1} parent=1 // loop_pre_header
      _
    $region3: #{tpu_custom_call.1} parent=1 // loop_header
      %s21 = sphi 0, %s25
      %p22 = scmp.ge.s32.totalorder %s21, 10
      %s28 = sphi 0, %s40
      %s29 = sphi 0, %s36
      %s30 = sphi 0, %s28
      %s31 = sphi 0, %s29
      %s32 = sphi 0, %s30
      %s33 = sphi 0, %s31
      %s43 = sphi 0, %s45
      %s46 = sphi 0, %s43
      %s47 = sphi 0, %s46
      %s63 = sphi 0, %s47
      %s67 = sphi 0, %s67
      %s69 = sphi 0, %s67
      %s70 = sphi 0, %s69
      %s84 = sphi 0, %s70
      %s88 = sphi 0, %s88
      %s90 = sphi 0, %s88
      %s91 = sphi 0, %s90
      %s105 = sphi 0, %s91
      %s109 = sphi 0, %s109
      %s111 = sphi 0, %s109
      %s112 = sphi 0, %s111
      %s126 = sphi 0, %s112
      %s130 = sphi 0, %s130
      %s132 = sphi 0, %s130
      %s133 = sphi 0, %s132
      %s147 = sphi 0, %s133
      %s153 = sphi 0, %s155
      %s156 = sphi 0, %s153
      %s157 = sphi 0, %s156
      %s173 = sphi 0, %s157
      %s179 = sphi 0, %s181
      %s182 = sphi 0, %s179
      %s183 = sphi 0, %s182
      %s199 = sphi 0, %s183
      %s207 = sphi 0, %s209
      %s210 = sphi 0, %s207
      %s211 = sphi 0, %s210
      %s227 = sphi 0, %s211
    $region4: #{tpu_custom_call.1} parent=1 // loop_header_branch
      %24 = sbr.rel (%p22) target = $region8
    $region5: #{tpu_custom_call.1} parent=1 // loop_body
      %s26 = ssub.s32 %s21, 1
      %s27 = ssub.s32 %s21, 2
      %s34 = sadd.s32 1, %s29
      %p35 = scmp.ge.s32.totalorder %s34, 8
      %s36 = scalar_select %p35, 0, %s34
      %s37 = sadd.s32 1, %s28
      %s38 = scalar_select %p35, %s37, %s28
      %p39 = scmp.ge.s32.totalorder %s38, 1
      %s40 = scalar_select %p39, 0, %s38
      %s41 = ssub.s32 %s28, %s40
      %p42 = scmp.eq.s32.totalorder %s41, 0
      %s44 = sadd.s32 %s43, 1
      %s45 = scalar_select %p42, %s43, %s44
      %p48 = pneg %p42
      %p49 = scmp.eq.s32.totalorder %s21, 7
      %p50 = por %p48, %p49
      %p51 = scmp.ne.s32.totalorder %s43, %s46
      %p52 = scmp.eq.s32.totalorder %s21, 0
      %p53 = por %p51, %p52
      %p54 = scmp.ne.s32.totalorder %s43, %s46
      %p55 = scmp.eq.s32.totalorder %s26, 7
      %p56 = por %p54, %p55
      %p57 = scmp.ne.s32.totalorder %s46, %s47
      %p58 = scmp.eq.s32.totalorder %s26, 0
      %p59 = por %p57, %p58
      %p60 = scmp.ne.s32.totalorder %s46, %s47
      %p61 = scmp.eq.s32.totalorder %s27, 7
      %p62 = por %p60, %p61
      %p64 = scmp.ne.s32.totalorder %s47, %s63
      %p65 = scmp.eq.s32.totalorder %s27, 0
      %p66 = por %p64, %p65
      %s68 = sadd.s32 %s67, 1
      %p71 = scmp.eq.s32.totalorder %s21, 7
      %p72 = scmp.ne.s32.totalorder %s67, %s69
      %p73 = scmp.eq.s32.totalorder %s21, 0
      %p74 = por %p72, %p73
      %p75 = scmp.ne.s32.totalorder %s67, %s69
      %p76 = scmp.eq.s32.totalorder %s26, 7
      %p77 = por %p75, %p76
      %p78 = scmp.ne.s32.totalorder %s69, %s70
      %p79 = scmp.eq.s32.totalorder %s26, 0
      %p80 = por %p78, %p79
      %p81 = scmp.ne.s32.totalorder %s69, %s70
      %p82 = scmp.eq.s32.totalorder %s27, 7
      %p83 = por %p81, %p82
      %p85 = scmp.ne.s32.totalorder %s70, %s84
      %p86 = scmp.eq.s32.totalorder %s27, 0
      %p87 = por %p85, %p86
      %s89 = sadd.s32 %s88, 1
      %p92 = scmp.eq.s32.totalorder %s21, 7
      %p93 = scmp.ne.s32.totalorder %s88, %s90
      %p94 = scmp.eq.s32.totalorder %s21, 0
      %p95 = por %p93, %p94
      %p96 = scmp.ne.s32.totalorder %s88, %s90
      %p97 = scmp.eq.s32.totalorder %s26, 7
      %p98 = por %p96, %p97
      %p99 = scmp.ne.s32.totalorder %s90, %s91
      %p100 = scmp.eq.s32.totalorder %s26, 0
      %p101 = por %p99, %p100
      %p102 = scmp.ne.s32.totalorder %s90, %s91
      %p103 = scmp.eq.s32.totalorder %s27, 7
      %p104 = por %p102, %p103
      %p106 = scmp.ne.s32.totalorder %s91, %s105
      %p107 = scmp.eq.s32.totalorder %s27, 0
      %p108 = por %p106, %p107
      %s110 = sadd.s32 %s109, 1
      %p113 = scmp.eq.s32.totalorder %s21, 7
      %p114 = scmp.ne.s32.totalorder %s109, %s111
      %p115 = scmp.eq.s32.totalorder %s21, 0
      %p116 = por %p114, %p115
      %p117 = scmp.ne.s32.totalorder %s109, %s111
      %p118 = scmp.eq.s32.totalorder %s26, 7
      %p119 = por %p117, %p118
      %p120 = scmp.ne.s32.totalorder %s111, %s112
      %p121 = scmp.eq.s32.totalorder %s26, 0
      %p122 = por %p120, %p121
      %p123 = scmp.ne.s32.totalorder %s111, %s112
      %p124 = scmp.eq.s32.totalorder %s27, 7
      %p125 = por %p123, %p124
      %p127 = scmp.ne.s32.totalorder %s112, %s126
      %p128 = scmp.eq.s32.totalorder %s27, 0
      %p129 = por %p127, %p128
      %s131 = sadd.s32 %s130, 1
      %p134 = scmp.eq.s32.totalorder %s21, 7
      %p135 = scmp.ne.s32.totalorder %s130, %s132
      %p136 = scmp.eq.s32.totalorder %s21, 0
      %p137 = por %p135, %p136
      %p138 = scmp.ne.s32.totalorder %s130, %s132
      %p139 = scmp.eq.s32.totalorder %s26, 7
      %p140 = por %p138, %p139
      %p141 = scmp.ne.s32.totalorder %s132, %s133
      %p142 = scmp.eq.s32.totalorder %s26, 0
      %p143 = por %p141, %p142
      %p144 = scmp.ne.s32.totalorder %s132, %s133
      %p145 = scmp.eq.s32.totalorder %s27, 7
      %p146 = por %p144, %p145
      %p148 = scmp.ne.s32.totalorder %s133, %s147
      %p149 = scmp.eq.s32.totalorder %s27, 0
      %p150 = por %p148, %p149
      %s151 = ssub.s32 %s29, %s36
      %p152 = scmp.eq.s32.totalorder %s151, 0
      %s154 = sadd.s32 %s153, 1
      %s155 = scalar_select %p152, %s153, %s154
      %p158 = pneg %p152
      %p159 = scmp.eq.s32.totalorder %s21, 7
      %p160 = por %p158, %p159
      %p161 = scmp.ne.s32.totalorder %s153, %s156
      %p162 = scmp.eq.s32.totalorder %s21, 0
      %p163 = por %p161, %p162
      %p164 = scmp.ne.s32.totalorder %s153, %s156
      %p165 = scmp.eq.s32.totalorder %s26, 7
      %p166 = por %p164, %p165
      %p167 = scmp.ne.s32.totalorder %s156, %s157
      %p168 = scmp.eq.s32.totalorder %s26, 0
      %p169 = por %p167, %p168
      %p170 = scmp.ne.s32.totalorder %s156, %s157
      %p171 = scmp.eq.s32.totalorder %s27, 7
      %p172 = por %p170, %p171
      %p174 = scmp.ne.s32.totalorder %s157, %s173
      %p175 = scmp.eq.s32.totalorder %s27, 0
      %p176 = por %p174, %p175
      %s177 = ssub.s32 %s29, %s36
      %p178 = scmp.eq.s32.totalorder %s177, 0
      %s180 = sadd.s32 %s179, 1
      %s181 = scalar_select %p178, %s179, %s180
      %p184 = pneg %p178
      %p185 = scmp.eq.s32.totalorder %s21, 7
      %p186 = por %p184, %p185
      %p187 = scmp.ne.s32.totalorder %s179, %s182
      %p188 = scmp.eq.s32.totalorder %s21, 0
      %p189 = por %p187, %p188
      %p190 = scmp.ne.s32.totalorder %s179, %s182
      %p191 = scmp.eq.s32.totalorder %s26, 7
      %p192 = por %p190, %p191
      %p193 = scmp.ne.s32.totalorder %s182, %s183
      %p194 = scmp.eq.s32.totalorder %s26, 0
      %p195 = por %p193, %p194
      %p196 = scmp.ne.s32.totalorder %s182, %s183
      %p197 = scmp.eq.s32.totalorder %s27, 7
      %p198 = por %p196, %p197
      %p200 = scmp.ne.s32.totalorder %s183, %s199
      %p201 = scmp.eq.s32.totalorder %s27, 0
      %p202 = por %p200, %p201
      %s203 = ssub.s32 %s28, %s40
      %s204 = ssub.s32 %s29, %s36
      %s205 = sor.u32 %s203, %s204
      %p206 = scmp.eq.s32.totalorder %s205, 0
      %s208 = sadd.s32 %s207, 1
      %s209 = scalar_select %p206, %s207, %s208
      %p212 = pneg %p206
      %p213 = scmp.eq.s32.totalorder %s21, 7
      %p214 = por %p212, %p213
      %p215 = scmp.ne.s32.totalorder %s207, %s210
      %p216 = scmp.eq.s32.totalorder %s21, 0
      %p217 = por %p215, %p216
      %p218 = scmp.ne.s32.totalorder %s207, %s210
      %p219 = scmp.eq.s32.totalorder %s26, 7
      %p220 = por %p218, %p219
      %p221 = scmp.ne.s32.totalorder %s210, %s211
      %p222 = scmp.eq.s32.totalorder %s26, 0
      %p223 = por %p221, %p222
      %p224 = scmp.ne.s32.totalorder %s210, %s211
      %p225 = scmp.eq.s32.totalorder %s27, 7
      %p226 = por %p224, %p225
      %p228 = scmp.ne.s32.totalorder %s211, %s227
      %p229 = scmp.eq.s32.totalorder %s27, 0
      %p230 = por %p228, %p229
      %p231 = scmp.le.s32.totalorder 1, %s21
      %p232 = scmp.lt.s32.totalorder %s21, 9
      %p233 = pnand %p231, %p232
      %p234 = pneg %p233
      // Predicated region
      $region9: #{tpu_custom_call.1} parent=5 // pred_check
        _
      $region10: #{tpu_custom_call.1} parent=5 // pred_check_branch
        %236 = sbr.rel (%p233) target = $region12
      $region11: #{tpu_custom_call.1} parent=5 // pred_region
        %s237 = ssub.s32 %s21, 1
        // Predicated region
        $region13: #{tpu_custom_call.1} parent=11 // pred_check
          %p238 = pneg %p59
        $region14: #{tpu_custom_call.1} parent=11 // pred_check_branch
          %240 = sbr.rel (%p238) target = $region16
        $region15: #{tpu_custom_call.1} parent=11 // pred_region
          %s242 = ssub.s32 64, 64
          %243 = vsyncadd [#allocation4], %s242
          %s244 = smul.addr %s30, 64
          %s245 = scalar_lea.hbm %s0, %s244
          %s247 = sshll.u32 [#allocation3], 4
          %s248 = int_to_ptr.vmem [resolvable:$true] %s247
          %250 = dma.hbm_to_vmem [thread:$0]  %s245, 64, %s248, [#allocation4]
        $region16: #{tpu_custom_call.1} parent=11 // pred_fallthru
          _
        // Predicated region
        $region17: #{tpu_custom_call.1} parent=11 // pred_check
          %p251 = pneg %p80
        $region18: #{tpu_custom_call.1} parent=11 // pred_check_branch
          %253 = sbr.rel (%p251) target = $region20
        $region19: #{tpu_custom_call.1} parent=11 // pred_region
          %s255 = ssub.s32 128, 128
          %256 = vsyncadd [#allocation7], %s255
          %s257 = sshll.u32 [#allocation6], 4
          %s258 = int_to_ptr.vmem [resolvable:$true] %s257
          %263 = dma.hbm_to_vmem [thread:$0]  %s1, 128, %s258, [#allocation7], 64, 64, 4
        $region20: #{tpu_custom_call.1} parent=11 // pred_fallthru
          _
        // Predicated region
        $region21: #{tpu_custom_call.1} parent=11 // pred_check
          %p264 = pneg %p101
        $region22: #{tpu_custom_call.1} parent=11 // pred_check_branch
          %266 = sbr.rel (%p264) target = $region24
        $region23: #{tpu_custom_call.1} parent=11 // pred_region
          _
        $region24: #{tpu_custom_call.1} parent=11 // pred_fallthru
          _
        // Predicated region
        $region25: #{tpu_custom_call.1} parent=11 // pred_check
          %p267 = pneg %p122
        $region26: #{tpu_custom_call.1} parent=11 // pred_check_branch
          %269 = sbr.rel (%p267) target = $region28
        $region27: #{tpu_custom_call.1} parent=11 // pred_region
          %s271 = ssub.s32 448, 448
          %272 = vsyncadd [#allocation7], %s271
          %s273 = sshll.u32 [#allocation8], 4
          %s274 = int_to_ptr.vmem [resolvable:$true] %s273
          %279 = dma.hbm_to_vmem [thread:$0]  %s3, 448, %s274, [#allocation7], 64, 64, 4
        $region28: #{tpu_custom_call.1} parent=11 // pred_fallthru
          _
        // Predicated region
        $region29: #{tpu_custom_call.1} parent=11 // pred_check
          %p280 = pneg %p143
        $region30: #{tpu_custom_call.1} parent=11 // pred_check_branch
          %282 = sbr.rel (%p280) target = $region32
        $region31: #{tpu_custom_call.1} parent=11 // pred_region
          _
        $region32: #{tpu_custom_call.1} parent=11 // pred_fallthru
          _
      $region12: #{tpu_custom_call.1} parent=5 // pred_fallthru
        _
      %p283 = scmp.lt.s32.totalorder %s21, 8
      // Predicated region
      $region33: #{tpu_custom_call.1} parent=5 // pred_check
        %p284 = pneg %p283
      $region34: #{tpu_custom_call.1} parent=5 // pred_check_branch
        %286 = sbr.rel (%p284) target = $region36
      $region35: #{tpu_custom_call.1} parent=5 // pred_region
        // Predicated region
        $region37: #{tpu_custom_call.1} parent=35 // pred_check
          %p287 = pneg %p163
        $region38: #{tpu_custom_call.1} parent=35 // pred_check_branch
          %289 = sbr.rel (%p287) target = $region40
        $region39: #{tpu_custom_call.1} parent=35 // pred_region
          %s290 = sand.u32 %s21, 1
          %s291 = scalar_lea.sflag [#allocation10], %s290
          %s292 = sand.u32 %s153, 1
          %s293 = smul.addr %s292, 208
          %s294 = scalar_lea.vmem [#allocation9], %s293
          %s295 = smul.u32 4, %s29
          %s297 = ssub.s32 3328, 3328
          %298 = vsyncadd %s291, %s297
          %s299 = smul.addr %s295, 64
          %s300 = scalar_lea.hbm %s5, %s299
          %s301 = sshll.u32 %s294, 4
          %s302 = int_to_ptr.vmem [resolvable:$true] %s301
          %307 = dma.hbm_to_vmem [thread:$0]  %s300, 3328, %s302, %s291, 2048, 256, 16
        $region40: #{tpu_custom_call.1} parent=35 // pred_fallthru
          _
        // Predicated region
        $region41: #{tpu_custom_call.1} parent=35 // pred_check
          %p308 = pneg %p189
        $region42: #{tpu_custom_call.1} parent=35 // pred_check_branch
          %310 = sbr.rel (%p308) target = $region44
        $region43: #{tpu_custom_call.1} parent=35 // pred_region
          %s311 = sand.u32 %s21, 1
          %s312 = scalar_lea.sflag [#allocation10], %s311
          %s313 = sand.u32 %s179, 1
          %s314 = smul.addr %s313, 4
          %s315 = scalar_lea.vmem [#allocation11], %s314
          %s316 = smul.u32 4, %s29
          %s318 = ssub.s32 64, 64
          %319 = vsyncadd %s312, %s318
          %s320 = smul.addr %s316, 16
          %s321 = scalar_lea.hbm %s6, %s320
          %s323 = sshll.u32 %s315, 4
          %s324 = int_to_ptr.vmem [resolvable:$true] %s323
          %326 = dma.hbm_to_vmem [thread:$0]  %s321, 64, %s324, %s312
        $region44: #{tpu_custom_call.1} parent=35 // pred_fallthru
          _
      $region36: #{tpu_custom_call.1} parent=5 // pred_fallthru
        _
      %p327 = scmp.le.s32.totalorder 1, %s21
      %p328 = scmp.lt.s32.totalorder %s21, 9
      %p329 = pnand %p327, %p328
      %p330 = pneg %p329
      // Predicated region
      $region45: #{tpu_custom_call.1} parent=5 // pred_check
        _
      $region46: #{tpu_custom_call.1} parent=5 // pred_check_branch
        %332 = sbr.rel (%p329) target = $region48
      $region47: #{tpu_custom_call.1} parent=5 // pred_region
        %s333 = ssub.s32 %s21, 1
        // Predicated region
        $region49: #{tpu_custom_call.1} parent=47 // pred_check
          %p334 = pneg %p59
        $region50: #{tpu_custom_call.1} parent=47 // pred_check_branch
          %336 = sbr.rel (%p334) target = $region52
        $region51: #{tpu_custom_call.1} parent=47 // pred_region
          %337 = dma.done [#allocation4], 64
        $region52: #{tpu_custom_call.1} parent=47 // pred_fallthru
          _
        // Predicated region
        $region53: #{tpu_custom_call.1} parent=47 // pred_check
          %p338 = pneg %p80
        $region54: #{tpu_custom_call.1} parent=47 // pred_check_branch
          %340 = sbr.rel (%p338) target = $region56
        $region55: #{tpu_custom_call.1} parent=47 // pred_region
          %341 = dma.done [#allocation7], 128
        $region56: #{tpu_custom_call.1} parent=47 // pred_fallthru
          _
        // Predicated region
        $region57: #{tpu_custom_call.1} parent=47 // pred_check
          %p342 = pneg %p122
        $region58: #{tpu_custom_call.1} parent=47 // pred_check_branch
          %344 = sbr.rel (%p342) target = $region60
        $region59: #{tpu_custom_call.1} parent=47 // pred_region
          %345 = dma.done [#allocation7], 448
        $region60: #{tpu_custom_call.1} parent=47 // pred_fallthru
          _
        %s346 = sand.u32 %s26, 1
        %s347 = scalar_lea.sflag [#allocation10], %s346
        %s348 = sand.u32 %s156, 1
        %s349 = smul.addr %s348, 208
        %s350 = scalar_lea.vmem [#allocation9], %s349
        // Predicated region
        $region61: #{tpu_custom_call.1} parent=47 // pred_check
          %p351 = pneg %p169
        $region62: #{tpu_custom_call.1} parent=47 // pred_check_branch
          %353 = sbr.rel (%p351) target = $region64
        $region63: #{tpu_custom_call.1} parent=47 // pred_region
          %354 = dma.done %s347, 3328
        $region64: #{tpu_custom_call.1} parent=47 // pred_fallthru
          _
        %s355 = sand.u32 %s26, 1
        %s356 = scalar_lea.sflag [#allocation10], %s355
        %s357 = sand.u32 %s182, 1
        %s358 = smul.addr %s357, 4
        %s359 = scalar_lea.vmem [#allocation11], %s358
        // Predicated region
        $region65: #{tpu_custom_call.1} parent=47 // pred_check
          %p360 = pneg %p195
        $region66: #{tpu_custom_call.1} parent=47 // pred_check_branch
          %362 = sbr.rel (%p360) target = $region68
        $region67: #{tpu_custom_call.1} parent=47 // pred_region
          %363 = dma.done %s356, 64
        $region68: #{tpu_custom_call.1} parent=47 // pred_fallthru
          _
        %p364 = pneg %p59
        %p365 = pneg %p56
        %p366 = pneg %p80
        %p367 = pneg %p77
        %p368 = pneg %p101
        %p369 = pneg %p98
        %p370 = pneg %p122
        %p371 = pneg %p119
        %p372 = pneg %p143
        %p373 = pneg %p140
        %s374 = sand.u32 %s26, 1
        %s375 = scalar_lea.sflag [#allocation10], %s374
        %s376 = sand.u32 %s156, 1
        %s377 = smul.addr %s376, 208
        %s378 = scalar_lea.vmem [#allocation9], %s377
        %p379 = pneg %p169
        %p380 = pneg %p166
        %s381 = sand.u32 %s26, 1
        %s382 = scalar_lea.sflag [#allocation10], %s381
        %s383 = sand.u32 %s182, 1
        %s384 = smul.addr %s383, 4
        %s385 = scalar_lea.vmem [#allocation11], %s384
        %p386 = pneg %p195
        %p387 = pneg %p192
        %p388 = pneg %p223
        %p389 = pneg %p220
        %s390 = sand.u32 %s210, 1
        %s391 = scalar_lea.sflag [#allocation5], %s390
        %s392 = sand.u32 %s210, 1
        %s393 = smul.addr %s392, 32
        %s394 = scalar_lea.vmem [#allocation12], %s393
        %s395 = smul.u32 4, %s31
        %s396 = smul.u32 4, %s31
        %s397 = smul.u32 4, %s31
        %p399 = scmp.eq.s32.totalorder %s31, 0
        // Predicated region
        $region69: #{tpu_custom_call.1} parent=47 // pred_check
          %p400 = pneg %p399
        $region70: #{tpu_custom_call.1} parent=47 // pred_check_branch
          %402 = sbr.rel (%p400) target = $region72
        $region71: #{tpu_custom_call.1} parent=47 // pred_region
          %v403 = vld [vmem:[#allocation3] sm:$0xf]
          %v404 = vld [vmem:[#allocation6] sm:$0xf]
          %v405 = vld [vmem:[#allocation6 + $0x4] sm:$0x1]
          %v406 = vld [vmem:[%s2] sm:$0x1]
          %v408 = vlaneseq
          %v409 = vshrl.u32 %v408, 7
          %v410 = vsub.s32 0, %v409
          %v411 = vrot.slane %v406, %v410
          %v415 = vunpack.c.l.b16 %v404
          %v416 = vunpack.c.l.b16 %v405
          %v417 = vpack.c.b16 %v416, %v415
          %vm418 = vcmask 80896
          %v420 = vsel %vm418, %v403, 0
          %vm422 = vcmask 1044480
          %v424 = vsel %vm422, %v417, 0
          %426 = vmatprep.subr.bf16.mxu0 0
          %427 = vmatpush1.bf16.msra.mxu0 %v424
          %428 = vmatprep.subr.bf16.mxu0 0
          %429 = vmatpush1.bf16.msra.mxu0 0
          %430 = vmatprep.subr.bf16.mxu0 0
          %431 = vmatpush1.bf16.msra.mxu0 0
          %432 = vmatprep.subr.bf16.mxu0 0
          %433 = vmatpush1.bf16.msra.mxu0 0
          %434 = vmatprep.subr.bf16.mxu0 0
          %435 = vmatpush1.bf16.msra.mxu0 0
          %436 = vmatprep.subr.bf16.mxu0 0
          %437 = vmatpush1.bf16.msra.mxu0 0
          %438 = vmatprep.subr.bf16.mxu0 0
          %439 = vmatpush1.bf16.msra.mxu0 0
          %440 = vmatprep.subr.bf16.mxu0 0
          %441 = vmatpush1.bf16.msra.mxu0 0
          %442 = vmatprep.subr.bf16.mxu0 0
          %443 = vmatpush1.bf16.msra.mxu0 0
          %444 = vmatprep.subr.bf16.mxu0 0
          %445 = vmatpush1.bf16.msra.mxu0 0
          %446 = vmatprep.subr.bf16.mxu0 0
          %447 = vmatpush1.bf16.msra.mxu0 0
          %448 = vmatprep.subr.bf16.mxu0 0
          %449 = vmatpush1.bf16.msra.mxu0 0
          %450 = vmatprep.subr.bf16.mxu0 0
          %451 = vmatpush1.bf16.msra.mxu0 0
          %452 = vmatprep.subr.bf16.mxu0 0
          %453 = vmatpush1.bf16.msra.mxu0 0
          %454 = vmatprep.subr.bf16.mxu0 0
          %455 = vmatpush1.bf16.msra.mxu0 0
          %456 = vmatprep.subr.bf16.mxu0 0
          %457 = vmatpush1.bf16.msra.mxu0 0
          %458 = vmatprep.mubr.bf16.mxu0 0
          %459 = vmatmul.mubr.bf16.gmra.mrb[0].mxu0 %v420
          %v460 = vpop.f32.mrb[0].mxu0
          %v461 = vadd.f32 %v411, %v460
          %v462 = vpop.f32.mrb[0].mxu0
          %v463 = vpop.f32.mrb[0].mxu0
          %v464 = vpop.f32.mrb[0].mxu0
          %465 = vdwg.mxu0
          %v466 = vmax.f32 %v461, 0.0
          %v467 = vpack.c.bf16 %v466, %v466
          %v468 = vld [vmem:[#allocation8] sm:$0xf]
          %v469 = vld [vmem:[#allocation8 + $0x4] sm:$0xf]
          %v470 = vld [vmem:[#allocation8 + $0x8] sm:$0xf]
          %v471 = vld [vmem:[#allocation8 + $0xc] sm:$0xf]
          %v472 = vld [vmem:[#allocation8 + $0x10] sm:$0xf]
          %v473 = vld [vmem:[#allocation8 + $0x14] sm:$0xf]
          %v474 = vld [vmem:[#allocation8 + $0x18] sm:$0x1]
          %v475 = vld [vmem:[%s4] sm:$0x1]
          %v477 = vlaneseq
          %v478 = vshrl.u32 %v477, 7
          %v479 = vsub.s32 0, %v478
          %v480 = vrot.slane %v475, %v479
          %v489 = vunpack.c.l.b16 %v468
          %v490 = vunpack.c.l.b16 %v469
          %v491 = vunpack.c.l.b16 %v470
          %v492 = vunpack.c.l.b16 %v471
          %v493 = vunpack.c.l.b16 %v472
          %v494 = vunpack.c.l.b16 %v473
          %v495 = vunpack.c.l.b16 %v474
          %v496 = vpack.c.b16 %v490, %v489
          %v497 = vpack.c.b16 %v492, %v491
          %v498 = vpack.c.b16 %v494, %v493
          %v499 = vpack.c.b16 %v495, %v495
          %vm503 = vcmask 408576
          %v505 = vsel %vm503, %v467, 0
          %vm507 = vcmask 1040384
          %v509 = vsel %vm507, %v499, 0
          %511 = vmatprep.subr.bf16.mxu0 0
          %512 = vmatpush1.bf16.msra.mxu0 %v496
          %513 = vmatprep.subr.bf16.mxu0 0
          %514 = vmatpush1.bf16.msra.mxu0 %v497
          %515 = vmatprep.subr.bf16.mxu0 0
          %516 = vmatpush1.bf16.msra.mxu0 %v498
          %517 = vmatprep.subr.bf16.mxu0 0
          %518 = vmatpush1.bf16.msra.mxu0 %v509
          %519 = vmatprep.subr.bf16.mxu0 0
          %520 = vmatpush1.bf16.msra.mxu0 0
          %521 = vmatprep.subr.bf16.mxu0 0
          %522 = vmatpush1.bf16.msra.mxu0 0
          %523 = vmatprep.subr.bf16.mxu0 0
          %524 = vmatpush1.bf16.msra.mxu0 0
          %525 = vmatprep.subr.bf16.mxu0 0
          %526 = vmatpush1.bf16.msra.mxu0 0
          %527 = vmatprep.subr.bf16.mxu0 0
          %528 = vmatpush1.bf16.msra.mxu0 0
          %529 = vmatprep.subr.bf16.mxu0 0
          %530 = vmatpush1.bf16.msra.mxu0 0
          %531 = vmatprep.subr.bf16.mxu0 0
          %532 = vmatpush1.bf16.msra.mxu0 0
          %533 = vmatprep.subr.bf16.mxu0 0
          %534 = vmatpush1.bf16.msra.mxu0 0
          %535 = vmatprep.subr.bf16.mxu0 0
          %536 = vmatpush1.bf16.msra.mxu0 0
          %537 = vmatprep.subr.bf16.mxu0 0
          %538 = vmatpush1.bf16.msra.mxu0 0
          %539 = vmatprep.subr.bf16.mxu0 0
          %540 = vmatpush1.bf16.msra.mxu0 0
          %541 = vmatprep.subr.bf16.mxu0 0
          %542 = vmatpush1.bf16.msra.mxu0 0
          %543 = vmatprep.mubr.bf16.mxu0 0
          %544 = vmatmul.mubr.bf16.gmra.mrb[0].mxu0 %v505
          %v545 = vpop.f32.mrb[0].mxu0
          %v546 = vadd.f32 %v480, %v545
          %v547 = vpop.f32.mrb[0].mxu0
          %v548 = vpop.f32.mrb[0].mxu0
          %v549 = vpop.f32.mrb[0].mxu0
          %550 = vdwg.mxu0
          %v551 = vmax.f32 %v546, 0.0
          %v552 = vpack.c.bf16 %v551, %v551
          %vm553 = vcmask 814080
          %554 = vst.msk [vmem:[#allocation2] sm:$0xf] %vm553, %v552
        $region72: #{tpu_custom_call.1} parent=47 // pred_fallthru
          _
        %v555 = vld [vmem:[#allocation2] sm:$0xf]
        %v556 = vld [vmem:[%s350] sm:$0xff]
        %v557 = vld [vmem:[%s350 + $0x8] sm:$0xff]
        %v558 = vld [vmem:[%s350 + $0x10] sm:$0xff]
        %v559 = vld [vmem:[%s350 + $0x18] sm:$0xff]
        %v560 = vld [vmem:[%s350 + $0x20] sm:$0xff]
        %v561 = vld [vmem:[%s350 + $0x28] sm:$0xff]
        %v562 = vld [vmem:[%s350 + $0x30] sm:$0xff]
        %v563 = vld [vmem:[%s350 + $0x38] sm:$0xff]
        %v564 = vld [vmem:[%s350 + $0x40] sm:$0xff]
        %v565 = vld [vmem:[%s350 + $0x48] sm:$0xff]
        %v566 = vld [vmem:[%s350 + $0x50] sm:$0xff]
        %v567 = vld [vmem:[%s350 + $0x58] sm:$0xff]
        %v568 = vld [vmem:[%s350 + $0x60] sm:$0xff]
        %v569 = vld [vmem:[%s350 + $0x68] sm:$0xff]
        %v570 = vld [vmem:[%s350 + $0x70] sm:$0xff]
        %v571 = vld [vmem:[%s350 + $0x78] sm:$0xff]
        %v572 = vld [vmem:[%s350 + $0x80] sm:$0xff]
        %v573 = vld [vmem:[%s350 + $0x88] sm:$0xff]
        %v574 = vld [vmem:[%s350 + $0x90] sm:$0xff]
        %v575 = vld [vmem:[%s350 + $0x98] sm:$0xff]
        %v576 = vld [vmem:[%s350 + $0xa0] sm:$0xff]
        %v577 = vld [vmem:[%s350 + $0xa8] sm:$0xff]
        %v578 = vld [vmem:[%s350 + $0xb0] sm:$0xff]
        %v579 = vld [vmem:[%s350 + $0xb8] sm:$0xff]
        %v580 = vld [vmem:[%s350 + $0xc0] sm:$0x33]
        %v581 = vld [vmem:[%s350 + $0xc8] sm:$0x33]
        %v582 = vld [vmem:[%s359] sm:$0xf]
        %v584 = vlaneseq
        %v585 = vshrl.u32 %v584, 7
        %v586 = vsub.s32 0, %v585
        %v587 = vrot.slane %v582, %v586
        %v588 = vlaneseq
        %v589 = vshrl.u32 %v588, 7
        %v590 = vsub.s32 1, %v589
        %v591 = vrot.slane %v582, %v590
        %v592 = vlaneseq
        %v593 = vshrl.u32 %v592, 7
        %v594 = vsub.s32 2, %v593
        %v595 = vrot.slane %v582, %v594
        %v596 = vlaneseq
        %v597 = vshrl.u32 %v596, 7
        %v598 = vsub.s32 3, %v597
        %v599 = vrot.slane %v582, %v598
        %v630 = vunpack.c.l.b16 %v556
        %v631 = vunpack.c.h.b16 %v556
        %v632 = vunpack.c.l.b16 %v557
        %v633 = vunpack.c.h.b16 %v557
        %v634 = vunpack.c.l.b16 %v558
        %v635 = vunpack.c.h.b16 %v558
        %v636 = vunpack.c.l.b16 %v559
        %v637 = vunpack.c.h.b16 %v559
        %v638 = vunpack.c.l.b16 %v560
        %v639 = vunpack.c.h.b16 %v560
        %v640 = vunpack.c.l.b16 %v561
        %v641 = vunpack.c.h.b16 %v561
        %v642 = vunpack.c.l.b16 %v562
        %v643 = vunpack.c.h.b16 %v562
        %v644 = vunpack.c.l.b16 %v563
        %v645 = vunpack.c.h.b16 %v563
        %v646 = vunpack.c.l.b16 %v564
        %v647 = vunpack.c.h.b16 %v564
        %v648 = vunpack.c.l.b16 %v565
        %v649 = vunpack.c.h.b16 %v565
        %v650 = vunpack.c.l.b16 %v566
        %v651 = vunpack.c.h.b16 %v566
        %v652 = vunpack.c.l.b16 %v567
        %v653 = vunpack.c.h.b16 %v567
        %v654 = vunpack.c.l.b16 %v568
        %v655 = vunpack.c.h.b16 %v568
        %v656 = vunpack.c.l.b16 %v569
        %v657 = vunpack.c.h.b16 %v569
        %v658 = vunpack.c.l.b16 %v570
        %v659 = vunpack.c.h.b16 %v570
        %v660 = vunpack.c.l.b16 %v571
        %v661 = vunpack.c.h.b16 %v571
        %v662 = vunpack.c.l.b16 %v572
        %v663 = vunpack.c.h.b16 %v572
        %v664 = vunpack.c.l.b16 %v573
        %v665 = vunpack.c.h.b16 %v573
        %v666 = vunpack.c.l.b16 %v574
        %v667 = vunpack.c.h.b16 %v574
        %v668 = vunpack.c.l.b16 %v575
        %v669 = vunpack.c.h.b16 %v575
        %v670 = vunpack.c.l.b16 %v576
        %v671 = vunpack.c.h.b16 %v576
        %v672 = vunpack.c.l.b16 %v577
        %v673 = vunpack.c.h.b16 %v577
        %v674 = vunpack.c.l.b16 %v578
        %v675 = vunpack.c.h.b16 %v578
        %v676 = vunpack.c.l.b16 %v579
        %v677 = vunpack.c.h.b16 %v579
        %v678 = vunpack.c.l.b16 %v580
        %v679 = vunpack.c.h.b16 %v580
        %v680 = vunpack.c.l.b16 %v581
        %v681 = vunpack.c.h.b16 %v581
        %v682 = vpack.c.b16 %v634, %v630
        %v683 = vpack.c.b16 %v635, %v631
        %v684 = vpack.c.b16 %v636, %v632
        %v685 = vpack.c.b16 %v637, %v633
        %v686 = vpack.c.b16 %v642, %v638
        %v687 = vpack.c.b16 %v643, %v639
        %v688 = vpack.c.b16 %v644, %v640
        %v689 = vpack.c.b16 %v645, %v641
        %v690 = vpack.c.b16 %v650, %v646
        %v691 = vpack.c.b16 %v651, %v647
        %v692 = vpack.c.b16 %v652, %v648
        %v693 = vpack.c.b16 %v653, %v649
        %v694 = vpack.c.b16 %v658, %v654
        %v695 = vpack.c.b16 %v659, %v655
        %v696 = vpack.c.b16 %v660, %v656
        %v697 = vpack.c.b16 %v661, %v657
        %v698 = vpack.c.b16 %v666, %v662
        %v699 = vpack.c.b16 %v667, %v663
        %v700 = vpack.c.b16 %v668, %v664
        %v701 = vpack.c.b16 %v669, %v665
        %v702 = vpack.c.b16 %v674, %v670
        %v703 = vpack.c.b16 %v675, %v671
        %v704 = vpack.c.b16 %v676, %v672
        %v705 = vpack.c.b16 %v677, %v673
        %v706 = vpack.c.b16 %v678, %v678
        %v707 = vpack.c.b16 %v679, %v679
        %v708 = vpack.c.b16 %v680, %v680
        %v709 = vpack.c.b16 %v681, %v681
        %vm734 = vcmask 818176
        %v736 = vsel %vm734, %v555, 0
        %vm738 = vcmask 1041408
        %v740 = vsel %vm738, %v706, 0
        %v743 = vsel %vm738, %v707, 0
        %v746 = vsel %vm738, %v708, 0
        %v749 = vsel %vm738, %v709, 0
        %751 = vmatprep.subr.bf16.mxu0 %v683
        %752 = vmatpush1.bf16.msra.mxu0 %v682
        %753 = vmatprep.subr.bf16.mxu0 %v687
        %754 = vmatpush1.bf16.msra.mxu0 %v686
        %755 = vmatprep.subr.bf16.mxu0 %v691
        %756 = vmatpush1.bf16.msra.mxu0 %v690
        %757 = vmatprep.subr.bf16.mxu0 %v695
        %758 = vmatpush1.bf16.msra.mxu0 %v694
        %759 = vmatprep.subr.bf16.mxu0 %v699
        %760 = vmatpush1.bf16.msra.mxu0 %v698
        %761 = vmatprep.subr.bf16.mxu0 %v703
        %762 = vmatpush1.bf16.msra.mxu0 %v702
        %763 = vmatprep.subr.bf16.mxu0 %v743
        %764 = vmatpush1.bf16.msra.mxu0 %v740
        %765 = vmatprep.subr.bf16.mxu0 0
        %766 = vmatpush1.bf16.msra.mxu0 0
        %767 = vmatprep.subr.bf16.mxu0 0
        %768 = vmatpush1.bf16.msra.mxu0 0
        %769 = vmatprep.subr.bf16.mxu0 0
        %770 = vmatpush1.bf16.msra.mxu0 0
        %771 = vmatprep.subr.bf16.mxu0 0
        %772 = vmatpush1.bf16.msra.mxu0 0
        %773 = vmatprep.subr.bf16.mxu0 0
        %774 = vmatpush1.bf16.msra.mxu0 0
        %775 = vmatprep.subr.bf16.mxu0 0
        %776 = vmatpush1.bf16.msra.mxu0 0
        %777 = vmatprep.subr.bf16.mxu0 0
        %778 = vmatpush1.bf16.msra.mxu0 0
        %779 = vmatprep.subr.bf16.mxu0 0
        %780 = vmatpush1.bf16.msra.mxu0 0
        %781 = vmatprep.subr.bf16.mxu0 0
        %782 = vmatpush1.bf16.msra.mxu0 0
        %783 = vmatprep.mubr.bf16.mxu0 0
        %784 = vmatmul.mubr.bf16.gmra.mrb[0].mxu0 %v736
        %v785 = vpop.f32.mrb[0].mxu0
        %v786 = vadd.f32 %v587, %v785
        %v787 = vpop.f32.mrb[0].mxu0
        %v788 = vadd.f32 %v591, %v787
        %v789 = vpop.f32.mrb[0].mxu0
        %v790 = vpop.f32.mrb[0].mxu0
        %791 = vdwg.mxu0
        %792 = vmatprep.subr.bf16.mxu0 %v685
        %793 = vmatpush1.bf16.msra.mxu0 %v684
        %794 = vmatprep.subr.bf16.mxu0 %v689
        %795 = vmatpush1.bf16.msra.mxu0 %v688
        %796 = vmatprep.subr.bf16.mxu0 %v693
        %797 = vmatpush1.bf16.msra.mxu0 %v692
        %798 = vmatprep.subr.bf16.mxu0 %v697
        %799 = vmatpush1.bf16.msra.mxu0 %v696
        %800 = vmatprep.subr.bf16.mxu0 %v701
        %801 = vmatpush1.bf16.msra.mxu0 %v700
        %802 = vmatprep.subr.bf16.mxu0 %v705
        %803 = vmatpush1.bf16.msra.mxu0 %v704
        %804 = vmatprep.subr.bf16.mxu0 %v749
        %805 = vmatpush1.bf16.msra.mxu0 %v746
        %806 = vmatprep.subr.bf16.mxu0 0
        %807 = vmatpush1.bf16.msra.mxu0 0
        %808 = vmatprep.subr.bf16.mxu0 0
        %809 = vmatpush1.bf16.msra.mxu0 0
        %810 = vmatprep.subr.bf16.mxu0 0
        %811 = vmatpush1.bf16.msra.mxu0 0
        %812 = vmatprep.subr.bf16.mxu0 0
        %813 = vmatpush1.bf16.msra.mxu0 0
        %814 = vmatprep.subr.bf16.mxu0 0
        %815 = vmatpush1.bf16.msra.mxu0 0
        %816 = vmatprep.subr.bf16.mxu0 0
        %817 = vmatpush1.bf16.msra.mxu0 0
        %818 = vmatprep.subr.bf16.mxu0 0
        %819 = vmatpush1.bf16.msra.mxu0 0
        %820 = vmatprep.subr.bf16.mxu0 0
        %821 = vmatpush1.bf16.msra.mxu0 0
        %822 = vmatprep.subr.bf16.mxu0 0
        %823 = vmatpush1.bf16.msra.mxu0 0
        %824 = vmatprep.mubr.bf16.mxu0 0
        %825 = vmatmul.mubr.bf16.gmra.mrb[0].mxu0 %v736
        %v826 = vpop.f32.mrb[0].mxu0
        %v827 = vadd.f32 %v595, %v826
        %v828 = vpop.f32.mrb[0].mxu0
        %v829 = vadd.f32 %v599, %v828
        %v830 = vpop.f32.mrb[0].mxu0
        %v831 = vpop.f32.mrb[0].mxu0
        %832 = vdwg.mxu0
        %v833 = vsub.f32 0.0, %v786
        %v834 = vsub.f32 0.0, %v788
        %v835 = vsub.f32 0.0, %v827
        %v836 = vsub.f32 0.0, %v829
        %v837 = vmul.f32 %v833, 1.442695
        %v838 = vpow.pop %v837
        %v839 = vmul.f32 %v834, 1.442695
        %v840 = vpow.pop %v839
        %v841 = vmul.f32 %v835, 1.442695
        %v842 = vpow.pop %v841
        %v843 = vmul.f32 %v836, 1.442695
        %v844 = vpow.pop %v843
        %v845 = vadd.f32 %v838, 1.0
        %v846 = vadd.f32 %v840, 1.0
        %v847 = vadd.f32 %v842, 1.0
        %v848 = vadd.f32 %v844, 1.0
        %v849 = vrcp.pop %v845
        %v850 = vrcp.pop %v846
        %v851 = vrcp.pop %v847
        %v852 = vrcp.pop %v848
        %853 = vst [vmem:[%s394] sm:$0xff] %v849
        %854 = vst [vmem:[%s394 + $0x8] sm:$0xff] %v850
        %855 = vst [vmem:[%s394 + $0x10] sm:$0xff] %v851
        %856 = vst [vmem:[%s394 + $0x18] sm:$0xff] %v852
        %s857 = sand.u32 %s210, 1
        %s858 = scalar_lea.sflag [#allocation5], %s857
        %s859 = sand.u32 %s210, 1
        %s860 = smul.addr %s859, 32
        %s861 = scalar_lea.vmem [#allocation12], %s860
        // Predicated region
        $region73: #{tpu_custom_call.1} parent=47 // pred_check
          %p862 = pneg %p220
        $region74: #{tpu_custom_call.1} parent=47 // pred_check_branch
          %864 = sbr.rel (%p862) target = $region76
        $region75: #{tpu_custom_call.1} parent=47 // pred_region
          %s865 = smul.u32 4, %s31
          %s867 = ssub.s32 512, 512
          %868 = vsyncadd %s858, %s867
          %s869 = smul.addr %s30, 32
          %s870 = sadd.s32 %s865, %s869
          %s871 = smul.addr %s870, 128
          %s872 = scalar_lea.hbm %s7, %s871
          %s874 = sshll.u32 %s861, 4
          %s875 = int_to_ptr.vmem [resolvable:$true] %s874
          %877 = dma.vmem_to_hbm [thread:$0]  %s875, 512, %s872, %s858
        $region76: #{tpu_custom_call.1} parent=47 // pred_fallthru
          _
      $region48: #{tpu_custom_call.1} parent=5 // pred_fallthru
        _
      %p878 = scmp.le.s32.totalorder 2, %s21
      // Predicated region
      $region77: #{tpu_custom_call.1} parent=5 // pred_check
        %p879 = pneg %p878
      $region78: #{tpu_custom_call.1} parent=5 // pred_check_branch
        %881 = sbr.rel (%p879) target = $region80
      $region79: #{tpu_custom_call.1} parent=5 // pred_region
        %s882 = ssub.s32 %s21, 2
        // Predicated region
        $region81: #{tpu_custom_call.1} parent=79 // pred_check
          %p883 = pneg %p226
        $region82: #{tpu_custom_call.1} parent=79 // pred_check_branch
          %885 = sbr.rel (%p883) target = $region84
        $region83: #{tpu_custom_call.1} parent=79 // pred_region
          %s886 = sand.u32 %s211, 1
          %s887 = scalar_lea.sflag [#allocation5], %s886
          %s888 = sand.u32 %s211, 1
          %s889 = smul.addr %s888, 32
          %s890 = scalar_lea.vmem [#allocation12], %s889
          %891 = dma.done %s887, 512
        $region84: #{tpu_custom_call.1} parent=79 // pred_fallthru
          _
      $region80: #{tpu_custom_call.1} parent=5 // pred_fallthru
        _
    $region6: #{tpu_custom_call.1} parent=1 // loop_footer
      %s25 = sadd.s32 1, %s21
    $region7: #{tpu_custom_call.1} parent=1 // loop_footer_branch
      %20 = sbr.rel target = $region3
    $region8: #{tpu_custom_call.1} parent=1 // loop_exit
      _
    %892 = vsyncpa [#allocation4], 1
    %s893 = scalar_lea.sflag [#allocation4], 1
    %894 = vsyncpa %s893, 1
    %895 = vsyncpa [#allocation7], 1
    %896 = vsyncpa [#allocation10], 1
    %s897 = scalar_lea.sflag [#allocation10], 1
    %898 = vsyncpa %s897, 1
    %899 = vsyncpa [#allocation5], 1
    %s900 = scalar_lea.sflag [#allocation5], 1
    %901 = vsyncpa %s900, 1

</llo_original>
